<compile_context>
chip_gen: v7x
topology: tpu7x:2x2x1
jax: 0.10.0
libtpu: 0.0.40
codegen_flags: <defaults>
</compile_context>

<pallas_src>
import jax
import jax.numpy as jnp
from jax.experimental import pallas as pl
from jax.experimental.pallas import tpu as pltpu


def _posembs_kernel(pk_ref, x_ref, tbl_ref, o_ref):
    """One row-tile: two-hot gather-matmul + add.

    pk_ref : (TILE, 1)   int32  packed indices  p1 | ((M1 + p2) << 16)
    x_ref  : (TILE, D)   f32    input rows
    tbl_ref: (NS, K, D)  bf16   packed-table planes; f32 sum of planes == table
    o_ref  : (TILE, D)   f32
    """
    tile = x_ref.shape[0]
    n_split, k, _ = tbl_ref.shape

    packed = pk_ref[...]                      # (TILE, 1)
    p1 = packed & 0xFFFF                      # row of table1 block
    p2 = packed >> 16                         # row of (M1-biased) table2 block

    # Two-hot row selector: exact 0/1 values, exactly representable in bf16.
    iota = jax.lax.broadcasted_iota(jnp.int32, (tile, k), 1)
    hot = ((iota == p1) | (iota == p2)).astype(tbl_ref.dtype)

    # One lane-dense (TILE, D) positional slab per table plane, f32 accumulate.
    # n_split is static (1 or 3) so this unrolls; summing hi+mid+lo in f32
    # reconstructs the original f32 embedding exactly (each dot contributes a
    # single exact bf16 row, all other two-hot terms hit exact zeros).
    pe = jnp.dot(hot, tbl_ref[0], preferred_element_type=jnp.float32)
    for s in range(1, n_split):
        pe = pe + jnp.dot(hot, tbl_ref[s], preferred_element_type=jnp.float32)

    o_ref[...] = (x_ref[...] + pe).astype(o_ref.dtype)


def _split_to_bf16_planes(tbl_f32, n_planes):
    """Split an f32 table into n bf16 planes whose f32 sum reconstructs it.

    n_planes=1 is a plain bf16 cast; n_planes=3 is an exact hi/mid/lo split
    (8+8+8 mantissa bits >= f32's 24), so sum(planes) == tbl_f32 bit-for-bit
    for normal f32 values.
    """
    planes = []
    rem = tbl_f32.astype(jnp.float32)
    for _ in range(n_planes):
        p = rem.astype(jnp.bfloat16)
        planes.append(p)
        rem = rem - p.astype(jnp.float32)
    return jnp.stack(planes)                  # (n_planes, K, D) bf16


def _pick_tile(n, tile_rows):
    """Row-tile size: big tiles for the HBM roofline, but >= 2 grid steps
    (>= 4 for large N) so v7x's two TensorCores both get work and the DMA
    pipeline has something to overlap."""
    if n <= 1024:
        return n                              # single full-extent block
    n_steps = 4 if n >= 4096 else 2
    tile = -(-n // n_steps)                   # cdiv
    tile = ((tile + 7) // 8) * 8              # keep sublane dim a multiple of 8
    return max(8, min(tile_rows, tile))


def position_embs(inputs, pos, table1, table2, *, exact=True, tile_rows=2048):
    """inputs: (B,S,D) f32; pos: (B,S,2) int; table_i: (max_pos_i, D//2) f32.

    exact=True  -> bit-exact f32 embedding gather (3 bf16 MXU passes).
    exact=False -> embeddings rounded to bf16 (single pass, fully HBM-bound).
    """
    B, S, D = inputs.shape
    M1, H1 = table1.shape
    M2, H2 = table2.shape
    assert H1 == H2 == D // 2 and 2 * H1 == D
    assert pos.shape == (B, S, 2)
    K = M1 + M2
    assert K < (1 << 15), "bit-packed int32 indices require M1 + M2 < 32768"

    N = B * S

    # Pack the two half-width tables into one (K, D) block-diagonal table:
    #   rows [0, M1)  fill columns [0, D/2)  with table1
    #   rows [M1, K)  fill columns [D/2, D)  with table2
    # then split into bf16 planes (1 or 3, see _split_to_bf16_planes).
    tbl = jnp.zeros((K, D), dtype=jnp.float32)
    tbl = tbl.at[:M1, :H1].set(table1.astype(jnp.float32))
    tbl = tbl.at[M1:, H1:].set(table2.astype(jnp.float32))
    tbl_planes = _split_to_bf16_planes(tbl, 3 if exact else 1)
    n_split = tbl_planes.shape[0]

    # Flatten rows; merge both index streams into ONE bit-packed (N,1) int32
    # (halves the lane-padded VMEM footprint / DMA descriptors of the indices).
    x2 = inputs.reshape(N, D)
    p1 = pos[:, :, 0].astype(jnp.int32)
    p2 = pos[:, :, 1].astype(jnp.int32) + M1
    pk = (p1 | (p2 << 16)).reshape(N, 1)

    tile = _pick_tile(N, tile_rows)
    grid = (pl.cdiv(N, tile),)                # no padding: partial last block is
                                              # masked by Pallas (safe: pure
                                              # add-and-store, no reductions)

    itemsize = jnp.dtype(inputs.dtype).itemsize
    out = pl.pallas_call(
        _posembs_kernel,
        out_shape=jax.ShapeDtypeStruct((N, D), inputs.dtype),
        grid_spec=pl.GridSpec(
            grid=grid,
            in_specs=[
                pl.BlockSpec((tile, 1), lambda i: (i, 0)),           # packed idx
                pl.BlockSpec((tile, D), lambda i: (i, 0)),           # input rows
                pl.BlockSpec((n_split, K, D), lambda i: (0, 0, 0)),  # table planes
            ],
            out_specs=pl.BlockSpec((tile, D), lambda i: (i, 0)),
        ),
        compiler_params=pltpu.CompilerParams(
            dimension_semantics=("parallel",),       # megacore-shardable rows
            vmem_limit_bytes=32 * 1024 * 1024,       # headroom for 2048-row tiles
        ),
        cost_estimate=pl.CostEstimate(
            flops=2 * N * K * D * n_split,
            transcendentals=0,
            bytes_accessed=2 * N * D * itemsize + N * 4 + n_split * K * D * 2,
        ),
    )(pk, x2, tbl_planes)

    return out.reshape(B, S, D)


def position_embs_ref(inputs, pos, table1, table2):
    """Pure-JAX reference matching the PyTorch forward."""
    e1 = table1[pos[:, :, 0]]
    e2 = table2[pos[:, :, 1]]
    return inputs + jnp.concatenate([e1, e2], axis=-1)


if __name__ == "__main__":
    # Module defaults: max_positions=[48, 256], embedding_dim=128.
    max_positions = [48, 256]
    embedding_dim = 128

    key = jax.random.PRNGKey(0)
    k_t1, k_t2, k_a, k_b = jax.random.split(key, 4)

    # Deterministic "learned" tables (nn.Embedding init ~ N(0,1)).
    table1 = jax.random.normal(k_t1, (max_positions[0], embedding_dim // 2),
                               dtype=jnp.float32)
    table2 = jax.random.normal(k_t2, (max_positions[1], embedding_dim // 2),
                               dtype=jnp.float32)

    def make_case(k, B, S):
        kx, k1, k2 = jax.random.split(k, 3)
        x = jax.random.normal(kx, (B, S, embedding_dim), dtype=jnp.float32)
        p = jnp.stack(
            [jax.random.randint(k1, (B, S), 0, max_positions[0]),
             jax.random.randint(k2, (B, S), 0, max_positions[1])],
            axis=-1,
        ).astype(jnp.int32)
        return x, p

    # Case A: module-spec small shape (B=2, S=8) -> single full-extent block.
    x_a, p_a = make_case(k_a, 2, 8)
    ref_a = position_embs_ref(x_a, p_a, table1, table2)

    # Exact (default) path: gather is bit-exact w.r.t. the f32 tables.
    out_a = jax.block_until_ready(position_embs(x_a, p_a, table1, table2))
    assert out_a.shape == (2, 8, embedding_dim)
    assert jnp.allclose(out_a, ref_a, atol=1e-6, rtol=0.0), "mismatch (A, exact)"

    # Fast bf16-table path: exact w.r.t. bf16-rounded tables, close to f32 ref.
    out_a_fast = jax.block_until_ready(
        position_embs(x_a, p_a, table1, table2, exact=False))
    ref_a_bf16 = position_embs_ref(
        x_a, p_a,
        table1.astype(jnp.bfloat16).astype(jnp.float32),
        table2.astype(jnp.bfloat16).astype(jnp.float32))
    assert jnp.allclose(out_a_fast, ref_a_bf16, atol=1e-6, rtol=0.0), \
        "mismatch (A, bf16 vs bf16-ref)"
    assert jnp.allclose(out_a_fast, ref_a, atol=5e-2, rtol=0.0), \
        "mismatch (A, bf16 vs f32-ref)"

    # Case B: N = 1250 rows -> 2 grid steps with a partial (masked) last block,
    # exercising the no-padding path.
    x_b, p_b = make_case(k_b, 5, 250)
    ref_b = position_embs_ref(x_b, p_b, table1, table2)
    out_b = jax.block_until_ready(position_embs(x_b, p_b, table1, table2))
    assert out_b.shape == (5, 250, embedding_dim)
    assert jnp.allclose(out_b, ref_b, atol=1e-6, rtol=0.0), "mismatch (B, exact)"

    print("KERNEL_OK")
</pallas_src>

<mosaic_0001>
module attributes {stable_mosaic.version = 11 : i64} {
  func.func @_posembs_kernel(%arg0: i32, %arg1: memref<16x1xi32, #tpu.memory_space<vmem>>, %arg2: memref<16x128xf32, #tpu.memory_space<vmem>>, %arg3: memref<3x304x128xbf16, #tpu.memory_space<vmem>>, %arg4: memref<16x128xf32, #tpu.memory_space<vmem>>) attributes {dimension_semantics = [#tpu.dimension_semantics<parallel>], iteration_bounds = array<i64: 1>, scalar_prefetch = 0 : i64, scratch_operands = 0 : i64, tpu.core_type = #tpu.core_type<tc>, window_params = [{transform_indices = @transform_0, window_bounds = array<i64: 16, 1>}, {transform_indices = @transform_1, window_bounds = array<i64: 16, 128>}, {pipeline_mode = #tpu.pipeline_mode<synchronous>, transform_indices = @transform_2, window_bounds = array<i64: 3, 304, 128>}, {transform_indices = @transform_3, window_bounds = array<i64: 16, 128>}]} {
    %c0 = arith.constant 0 : index
    %c0_0 = arith.constant 0 : index
    %0 = vector.load %arg1[%c0, %c0_0] : memref<16x1xi32, #tpu.memory_space<vmem>>, vector<16x1xi32>
    %c65535_i32 = arith.constant 65535 : i32
    %1 = vector.broadcast %c65535_i32 : i32 to vector<16x1xi32>
    %2 = arith.andi %0, %1 : vector<16x1xi32>
    %c16_i32 = arith.constant 16 : i32
    %3 = vector.broadcast %c16_i32 : i32 to vector<16x1xi32>
    %4 = arith.shrsi %0, %3 : vector<16x1xi32>
    %5 = tpu.iota {dimensions = array<i32: 1>} : vector<16x304xi32>
    %6 = vector.broadcast %2 : vector<16x1xi32> to vector<16x304xi32>
    %7 = arith.cmpi eq, %5, %6 : vector<16x304xi32>
    %8 = vector.broadcast %4 : vector<16x1xi32> to vector<16x304xi32>
    %9 = arith.cmpi eq, %5, %8 : vector<16x304xi32>
    %10 = arith.ori %7, %9 : vector<16x304xi1>
    %11 = arith.extui %10 : vector<16x304xi1> to vector<16x304xi32>
    %12 = arith.sitofp %11 : vector<16x304xi32> to vector<16x304xf32>
    %13 = arith.truncf %12 : vector<16x304xf32> to vector<16x304xbf16>
    %c0_1 = arith.constant 0 : index
    %c0_2 = arith.constant 0 : index
    %c0_3 = arith.constant 0 : index
    %14 = vector.load %arg3[%c0_1, %c0_2, %c0_3] : memref<3x304x128xbf16, #tpu.memory_space<vmem>>, vector<1x304x128xbf16>
    %15 = vector.shape_cast %14 : vector<1x304x128xbf16> to vector<304x128xbf16>
    %cst = arith.constant dense<0.000000e+00> : vector<16x128xf32>
    %16 = tpu.matmul %13, %15, %cst {dimension_numbers = #tpu.dot_dimension_numbers<[1], [0], [0], [1], [0, 0, 1, 1], [], []>} : vector<16x304xbf16>, vector<304x128xbf16>, vector<16x128xf32> -> vector<16x128xf32>
    %c1 = arith.constant 1 : index
    %c0_4 = arith.constant 0 : index
    %c0_5 = arith.constant 0 : index
    %17 = vector.load %arg3[%c1, %c0_4, %c0_5] : memref<3x304x128xbf16, #tpu.memory_space<vmem>>, vector<1x304x128xbf16>
    %18 = vector.shape_cast %17 : vector<1x304x128xbf16> to vector<304x128xbf16>
    %cst_6 = arith.constant dense<0.000000e+00> : vector<16x128xf32>
    %19 = tpu.matmul %13, %18, %cst_6 {dimension_numbers = #tpu.dot_dimension_numbers<[1], [0], [0], [1], [0, 0, 1, 1], [], []>} : vector<16x304xbf16>, vector<304x128xbf16>, vector<16x128xf32> -> vector<16x128xf32>
    %20 = arith.addf %16, %19 : vector<16x128xf32>
    %c2 = arith.constant 2 : index
    %c0_7 = arith.constant 0 : index
    %c0_8 = arith.constant 0 : index
    %21 = vector.load %arg3[%c2, %c0_7, %c0_8] : memref<3x304x128xbf16, #tpu.memory_space<vmem>>, vector<1x304x128xbf16>
    %22 = vector.shape_cast %21 : vector<1x304x128xbf16> to vector<304x128xbf16>
    %cst_9 = arith.constant dense<0.000000e+00> : vector<16x128xf32>
    %23 = tpu.matmul %13, %22, %cst_9 {dimension_numbers = #tpu.dot_dimension_numbers<[1], [0], [0], [1], [0, 0, 1, 1], [], []>} : vector<16x304xbf16>, vector<304x128xbf16>, vector<16x128xf32> -> vector<16x128xf32>
    %24 = arith.addf %20, %23 : vector<16x128xf32>
    %c0_10 = arith.constant 0 : index
    %c0_11 = arith.constant 0 : index
    %25 = vector.load %arg2[%c0_10, %c0_11] : memref<16x128xf32, #tpu.memory_space<vmem>>, vector<16x128xf32>
    %26 = arith.addf %25, %24 : vector<16x128xf32>
    %c0_12 = arith.constant 0 : index
    %c0_13 = arith.constant 0 : index
    %27 = vector.load %arg4[%c0_12, %c0_13] : memref<16x128xf32, #tpu.memory_space<vmem>>, vector<16x128xf32>
    tpu.vector_store %arg4[%c0_12, %c0_13], %26 {strides = array<i32>} : memref<16x128xf32, #tpu.memory_space<vmem>>, vector<16x128xf32>,
    return
  }
  func.func @transform_0(%arg0: i32) -> (i32, i32) {
    %c0_i32 = arith.constant 0 : i32
    %c0_i32_0 = arith.constant 0 : i32
    return %arg0, %c0_i32 : i32, i32
  }
  func.func @transform_1(%arg0: i32) -> (i32, i32) {
    %c0_i32 = arith.constant 0 : i32
    %c0_i32_0 = arith.constant 0 : i32
    return %arg0, %c0_i32 : i32, i32
  }
  func.func @transform_2(%arg0: i32) -> (i32, i32, i32) {
    %c0_i32 = arith.constant 0 : i32
    %c0_i32_0 = arith.constant 0 : i32
    %c0_i32_1 = arith.constant 0 : i32
    %c0_i32_2 = arith.constant 0 : i32
    return %c0_i32, %c0_i32_0, %c0_i32_1 : i32, i32, i32
  }
  func.func @transform_3(%arg0: i32) -> (i32, i32) {
    %c0_i32 = arith.constant 0 : i32
    %c0_i32_0 = arith.constant 0 : i32
    return %arg0, %c0_i32 : i32, i32
  }
}

</mosaic_0001>

<llo_original>
// kernel: tpu_custom_call.1
$region0: #{tpu_custom_call.1}
  #allocation0 [shape = 'u32[]', space=smem, size = 0x4, offset = 0x4, fixed_abs, tag = 'smem constant byte address 0x4 - core index']
  #allocation1 [shape = 'u32[144,128]{1,0:T(1,128)}', space=vmem, size = 0x12000, scoped, tag = 'internal scratch']
  %s0 = inlined_call_operand.vmem [shape: s32[16,1], index: 0, kind: input, shape index: {}]
  %s1 = inlined_call_operand.vmem [shape: f32[16,128], index: 1, kind: input, shape index: {}]
  %s2 = inlined_call_operand.hbm [shape: bf16[3,304,128], index: 2, kind: input, shape index: {}]
  %s3 = inlined_call_operand.hbm [shape: f32[16,128], index: 3, kind: output, shape index: {}]
  %s4 = sld [smem:[#allocation0]]
  $region26: #{tpu_custom_call.1} parent=0
    _
  %s6 = ssub.s32 1, %s4
  %s7 = scalar_select 0, %s6, %s4
  $region1: #{tpu_custom_call.1} parent=0
    #allocation2 [shape = 'u8[233472]{0}', space=vmem, size = 0x39000, scoped, tag = 'input window, operand 2, single buffered']
    #allocation3 [shape = 's32[1]{0}', space=sflag, size = 0x4, scoped, tag = 'scoped memory for tpu_custom_call.1']
    #allocation4 [shape = 's32[1]{0}', space=sflag, size = 0x4, scoped, tag = 'scoped memory for tpu_custom_call.1']
    #allocation5 [shape = 'u8[8192]{0}', space=vmem, size = 0x2000, scoped, tag = 'output window, operand 0, single buffered']
    %8 = vsyncpa [#allocation3], 0
    %9 = vsyncpa [#allocation4], 0
    // Predicated region
    $region2: #{tpu_custom_call.1} parent=1 // pred_check
      _
    $region3: #{tpu_custom_call.1} parent=1 // pred_check_branch
      %11 = sbr.rel (0) target = $region5
    $region4: #{tpu_custom_call.1} parent=1 // pred_region
      _
    $region5: #{tpu_custom_call.1} parent=1 // pred_fallthru
      _
    // Predicated region
    $region6: #{tpu_custom_call.1} parent=1 // pred_check
      _
    $region7: #{tpu_custom_call.1} parent=1 // pred_check_branch
      %13 = sbr.rel (0) target = $region9
    $region8: #{tpu_custom_call.1} parent=1 // pred_region
      _
    $region9: #{tpu_custom_call.1} parent=1 // pred_fallthru
      _
    // Predicated region
    $region10: #{tpu_custom_call.1} parent=1 // pred_check
      _
    $region11: #{tpu_custom_call.1} parent=1 // pred_check_branch
      %15 = sbr.rel (0) target = $region13
    $region12: #{tpu_custom_call.1} parent=1 // pred_region
      %s17 = ssub.s32 7296, 7296
      %18 = vsyncadd [#allocation3], %s17
      %s19 = sshll.u32 [#allocation2], 4
      %s20 = int_to_ptr.vmem [resolvable:$true] %s19
      %25 = dma.hbm_to_vmem [thread:$0]  %s2, 7296, %s20, [#allocation3], 64, 64, 4
    $region13: #{tpu_custom_call.1} parent=1 // pred_fallthru
      _
    // Predicated region
    $region14: #{tpu_custom_call.1} parent=1 // pred_check
      _
    $region15: #{tpu_custom_call.1} parent=1 // pred_check_branch
      %27 = sbr.rel (0) target = $region17
    $region16: #{tpu_custom_call.1} parent=1 // pred_region
      %28 = dma.done [#allocation3], 7296
    $region17: #{tpu_custom_call.1} parent=1 // pred_fallthru
      _
    %v30 = vld [vmem:[%s0] sm:$0xff]
    %v31 = vld [vmem:[%s0 + $0x8] sm:$0xff]
    %v32 = vand.u32 %v30, 65535
    %v33 = vand.u32 %v31, 65535
    %v34 = vshra.s32 %v30, 16
    %v35 = vshra.s32 %v31, 16
    %v36 = vlaneseq
    %v37 = vand.u32 %v36, 127
    %v38 = vadd.s32 %v37, 128
    %v39 = vadd.s32 %v37, 256
    %40 = vset.pattern.permute.xlu0 0
    %41 = vperm.xlu0 %40, %v32
    %v42 = vpop.permute.xlu0 %41
    %43 = vset.pattern.permute.xlu0 0
    %44 = vperm.xlu0 %43, %v33
    %v45 = vpop.permute.xlu0 %44
    %vm46 = vcmp.eq.s32.totalorder %v37, %v42
    %vm47 = vcmp.eq.s32.totalorder %v38, %v42
    %vm48 = vcmp.eq.s32.totalorder %v39, %v42
    %vm49 = vcmp.eq.s32.totalorder %v37, %v45
    %vm50 = vcmp.eq.s32.totalorder %v38, %v45
    %vm51 = vcmp.eq.s32.totalorder %v39, %v45
    %52 = vset.pattern.permute.xlu0 0
    %53 = vperm.xlu0 %52, %v34
    %v54 = vpop.permute.xlu0 %53
    %55 = vset.pattern.permute.xlu0 0
    %56 = vperm.xlu0 %55, %v35
    %v57 = vpop.permute.xlu0 %56
    %vm58 = vcmp.eq.s32.totalorder %v37, %v54
    %vm59 = vcmp.eq.s32.totalorder %v38, %v54
    %vm60 = vcmp.eq.s32.totalorder %v39, %v54
    %vm61 = vcmp.eq.s32.totalorder %v37, %v57
    %vm62 = vcmp.eq.s32.totalorder %v38, %v57
    %vm63 = vcmp.eq.s32.totalorder %v39, %v57
    %vm64 = vmor %vm46, %vm58
    %vm65 = vmor %vm47, %vm59
    %vm66 = vmor %vm48, %vm60
    %vm67 = vmor %vm49, %vm61
    %vm68 = vmor %vm50, %vm62
    %vm69 = vmor %vm51, %vm63
    %v70 = vsel %vm64, 1, 0
    %v71 = vsel %vm65, 1, 0
    %v72 = vsel %vm66, 1, 0
    %v73 = vsel %vm67, 1, 0
    %v74 = vsel %vm68, 1, 0
    %v75 = vsel %vm69, 1, 0
    %v76 = vcvt.s32.f32 %v70
    %v77 = vcvt.s32.f32 %v71
    %v78 = vcvt.s32.f32 %v72
    %v79 = vcvt.s32.f32 %v73
    %v80 = vcvt.s32.f32 %v74
    %v81 = vcvt.s32.f32 %v75
    %v82 = vpack.c.bf16 %v79, %v76
    %v83 = vpack.c.bf16 %v80, %v77
    %v84 = vpack.c.bf16 %v81, %v78
    %v85 = vld [vmem:[#allocation2] sm:$0xf]
    %v86 = vld [vmem:[#allocation2 + $0x4] sm:$0xf]
    %v87 = vld [vmem:[#allocation2 + $0x8] sm:$0xf]
    %v88 = vld [vmem:[#allocation2 + $0xc] sm:$0xf]
    %v89 = vld [vmem:[#allocation2 + $0x10] sm:$0xf]
    %v90 = vld [vmem:[#allocation2 + $0x14] sm:$0xf]
    %v91 = vld [vmem:[#allocation2 + $0x18] sm:$0xf]
    %v92 = vld [vmem:[#allocation2 + $0x1c] sm:$0xf]
    %v93 = vld [vmem:[#allocation2 + $0x20] sm:$0xf]
    %v94 = vld [vmem:[#allocation2 + $0x24] sm:$0xf]
    %v95 = vld [vmem:[#allocation2 + $0x28] sm:$0xf]
    %v96 = vld [vmem:[#allocation2 + $0x2c] sm:$0xf]
    %v97 = vld [vmem:[#allocation2 + $0x30] sm:$0xf]
    %v98 = vld [vmem:[#allocation2 + $0x34] sm:$0xf]
    %v99 = vld [vmem:[#allocation2 + $0x38] sm:$0xf]
    %v100 = vld [vmem:[#allocation2 + $0x3c] sm:$0xf]
    %v101 = vld [vmem:[#allocation2 + $0x40] sm:$0xf]
    %v102 = vld [vmem:[#allocation2 + $0x44] sm:$0xf]
    %v103 = vld [vmem:[#allocation2 + $0x48] sm:$0xf]
    %v104 = vld [vmem:[#allocation2 + $0x4c] sm:$0xf]
    %v105 = vld [vmem:[#allocation2 + $0x50] sm:$0xf]
    %v106 = vld [vmem:[#allocation2 + $0x54] sm:$0xf]
    %v107 = vld [vmem:[#allocation2 + $0x58] sm:$0xf]
    %v108 = vld [vmem:[#allocation2 + $0x5c] sm:$0xf]
    %v109 = vld [vmem:[#allocation2 + $0x60] sm:$0xf]
    %v110 = vld [vmem:[#allocation2 + $0x64] sm:$0xf]
    %v111 = vld [vmem:[#allocation2 + $0x68] sm:$0xf]
    %v112 = vld [vmem:[#allocation2 + $0x6c] sm:$0xf]
    %v113 = vld [vmem:[#allocation2 + $0x70] sm:$0xf]
    %v114 = vld [vmem:[#allocation2 + $0x74] sm:$0xf]
    %v115 = vld [vmem:[#allocation2 + $0x78] sm:$0xf]
    %v116 = vld [vmem:[#allocation2 + $0x7c] sm:$0xf]
    %v117 = vld [vmem:[#allocation2 + $0x80] sm:$0xf]
    %v118 = vld [vmem:[#allocation2 + $0x84] sm:$0xf]
    %v119 = vld [vmem:[#allocation2 + $0x88] sm:$0xf]
    %v120 = vld [vmem:[#allocation2 + $0x8c] sm:$0xf]
    %v121 = vld [vmem:[#allocation2 + $0x90] sm:$0xf]
    %v122 = vld [vmem:[#allocation2 + $0x94] sm:$0xf]
    %s123 = scalar_lea.vmem [#allocation2], 152
    %v124 = vld [vmem:[%s123] sm:$0xf]
    %v125 = vld [vmem:[%s123 + $0x4] sm:$0xf]
    %v126 = vld [vmem:[%s123 + $0x8] sm:$0xf]
    %v127 = vld [vmem:[%s123 + $0xc] sm:$0xf]
    %v128 = vld [vmem:[%s123 + $0x10] sm:$0xf]
    %v129 = vld [vmem:[%s123 + $0x14] sm:$0xf]
    %v130 = vld [vmem:[%s123 + $0x18] sm:$0xf]
    %v131 = vld [vmem:[%s123 + $0x1c] sm:$0xf]
    %v132 = vld [vmem:[%s123 + $0x20] sm:$0xf]
    %v133 = vld [vmem:[%s123 + $0x24] sm:$0xf]
    %v134 = vld [vmem:[%s123 + $0x28] sm:$0xf]
    %v135 = vld [vmem:[%s123 + $0x2c] sm:$0xf]
    %v136 = vld [vmem:[%s123 + $0x30] sm:$0xf]
    %v137 = vld [vmem:[%s123 + $0x34] sm:$0xf]
    %v138 = vld [vmem:[%s123 + $0x38] sm:$0xf]
    %v139 = vld [vmem:[%s123 + $0x3c] sm:$0xf]
    %v140 = vld [vmem:[%s123 + $0x40] sm:$0xf]
    %v141 = vld [vmem:[%s123 + $0x44] sm:$0xf]
    %v142 = vld [vmem:[%s123 + $0x48] sm:$0xf]
    %v143 = vld [vmem:[%s123 + $0x4c] sm:$0xf]
    %v144 = vld [vmem:[%s123 + $0x50] sm:$0xf]
    %v145 = vld [vmem:[%s123 + $0x54] sm:$0xf]
    %v146 = vld [vmem:[%s123 + $0x58] sm:$0xf]
    %v147 = vld [vmem:[%s123 + $0x5c] sm:$0xf]
    %v148 = vld [vmem:[%s123 + $0x60] sm:$0xf]
    %v149 = vld [vmem:[%s123 + $0x64] sm:$0xf]
    %v150 = vld [vmem:[%s123 + $0x68] sm:$0xf]
    %v151 = vld [vmem:[%s123 + $0x6c] sm:$0xf]
    %v152 = vld [vmem:[%s123 + $0x70] sm:$0xf]
    %v153 = vld [vmem:[%s123 + $0x74] sm:$0xf]
    %v154 = vld [vmem:[%s123 + $0x78] sm:$0xf]
    %v155 = vld [vmem:[%s123 + $0x7c] sm:$0xf]
    %v156 = vld [vmem:[%s123 + $0x80] sm:$0xf]
    %v157 = vld [vmem:[%s123 + $0x84] sm:$0xf]
    %v158 = vld [vmem:[%s123 + $0x88] sm:$0xf]
    %v159 = vld [vmem:[%s123 + $0x8c] sm:$0xf]
    %v160 = vld [vmem:[%s123 + $0x90] sm:$0xf]
    %v161 = vld [vmem:[%s123 + $0x94] sm:$0xf]
    %v200 = vunpack.c.l.b16 %v124
    %v201 = vunpack.c.l.b16 %v125
    %v202 = vunpack.c.l.b16 %v126
    %v203 = vunpack.c.l.b16 %v127
    %v204 = vunpack.c.l.b16 %v128
    %v205 = vunpack.c.l.b16 %v129
    %v206 = vunpack.c.l.b16 %v130
    %v207 = vunpack.c.l.b16 %v131
    %v208 = vunpack.c.l.b16 %v132
    %v209 = vunpack.c.l.b16 %v133
    %v210 = vunpack.c.l.b16 %v134
    %v211 = vunpack.c.l.b16 %v135
    %v212 = vunpack.c.l.b16 %v136
    %v213 = vunpack.c.l.b16 %v137
    %v214 = vunpack.c.l.b16 %v138
    %v215 = vunpack.c.l.b16 %v139
    %v216 = vunpack.c.l.b16 %v140
    %v217 = vunpack.c.l.b16 %v141
    %v218 = vunpack.c.l.b16 %v142
    %v219 = vunpack.c.l.b16 %v143
    %v220 = vunpack.c.l.b16 %v144
    %v221 = vunpack.c.l.b16 %v145
    %v222 = vunpack.c.l.b16 %v146
    %v223 = vunpack.c.l.b16 %v147
    %v224 = vunpack.c.l.b16 %v148
    %v225 = vunpack.c.l.b16 %v149
    %v226 = vunpack.c.l.b16 %v150
    %v227 = vunpack.c.l.b16 %v151
    %v228 = vunpack.c.l.b16 %v152
    %v229 = vunpack.c.l.b16 %v153
    %v230 = vunpack.c.l.b16 %v154
    %v231 = vunpack.c.l.b16 %v155
    %v232 = vunpack.c.l.b16 %v156
    %v233 = vunpack.c.l.b16 %v157
    %v234 = vunpack.c.l.b16 %v158
    %v235 = vunpack.c.l.b16 %v159
    %v236 = vunpack.c.l.b16 %v160
    %v237 = vunpack.c.l.b16 %v161
    %v238 = vpack.c.b16 %v201, %v200
    %v239 = vpack.c.b16 %v203, %v202
    %v240 = vpack.c.b16 %v205, %v204
    %v241 = vpack.c.b16 %v207, %v206
    %v242 = vpack.c.b16 %v209, %v208
    %v243 = vpack.c.b16 %v211, %v210
    %v244 = vpack.c.b16 %v213, %v212
    %v245 = vpack.c.b16 %v215, %v214
    %v246 = vpack.c.b16 %v217, %v216
    %v247 = vpack.c.b16 %v219, %v218
    %v248 = vpack.c.b16 %v221, %v220
    %v249 = vpack.c.b16 %v223, %v222
    %v250 = vpack.c.b16 %v225, %v224
    %v251 = vpack.c.b16 %v227, %v226
    %v252 = vpack.c.b16 %v229, %v228
    %v253 = vpack.c.b16 %v231, %v230
    %v254 = vpack.c.b16 %v233, %v232
    %v255 = vpack.c.b16 %v235, %v234
    %v256 = vpack.c.b16 %v237, %v236
    %vm276 = vcmask 392192
    %v278 = vsel %vm276, %v84, 0
    %280 = vmatprep.subr.bf16.mxu0 0
    %281 = vmatpush1.bf16.msra.mxu0 %v238
    %282 = vmatprep.subr.bf16.mxu0 0
    %283 = vmatpush1.bf16.msra.mxu0 %v239
    %284 = vmatprep.subr.bf16.mxu0 0
    %285 = vmatpush1.bf16.msra.mxu0 %v240
    %286 = vmatprep.subr.bf16.mxu0 0
    %287 = vmatpush1.bf16.msra.mxu0 %v241
    %288 = vmatprep.subr.bf16.mxu0 0
    %289 = vmatpush1.bf16.msra.mxu0 %v242
    %290 = vmatprep.subr.bf16.mxu0 0
    %291 = vmatpush1.bf16.msra.mxu0 %v243
    %292 = vmatprep.subr.bf16.mxu0 0
    %293 = vmatpush1.bf16.msra.mxu0 %v244
    %294 = vmatprep.subr.bf16.mxu0 0
    %295 = vmatpush1.bf16.msra.mxu0 %v245
    %296 = vmatprep.subr.bf16.mxu0 0
    %297 = vmatpush1.bf16.msra.mxu0 %v246
    %298 = vmatprep.subr.bf16.mxu0 0
    %299 = vmatpush1.bf16.msra.mxu0 %v247
    %300 = vmatprep.subr.bf16.mxu0 0
    %301 = vmatpush1.bf16.msra.mxu0 %v248
    %302 = vmatprep.subr.bf16.mxu0 0
    %303 = vmatpush1.bf16.msra.mxu0 %v249
    %304 = vmatprep.subr.bf16.mxu0 0
    %305 = vmatpush1.bf16.msra.mxu0 %v250
    %306 = vmatprep.subr.bf16.mxu0 0
    %307 = vmatpush1.bf16.msra.mxu0 %v251
    %308 = vmatprep.subr.bf16.mxu0 0
    %309 = vmatpush1.bf16.msra.mxu0 %v252
    %310 = vmatprep.subr.bf16.mxu0 0
    %311 = vmatpush1.bf16.msra.mxu0 %v253
    %312 = vmatprep.mubr.bf16.mxu0 %v83
    %313 = vmatmul.mubr.bf16.gmra.mrb[0].mxu0 %v82
    %v314 = vpop.f32.mrb[0].mxu0
    %v315 = vadd.f32 0.0, %v314
    %v316 = vpop.f32.mrb[0].mxu0
    %v317 = vpop.f32.mrb[0].mxu0
    %v318 = vadd.f32 0.0, %v317
    %v319 = vpop.f32.mrb[0].mxu0
    %320 = vdwg.mxu0
    %321 = vmatprep.subr.bf16.mxu0 0
    %322 = vmatpush1.bf16.msra.mxu0 %v254
    %323 = vmatprep.subr.bf16.mxu0 0
    %324 = vmatpush1.bf16.msra.mxu0 %v255
    %325 = vmatprep.subr.bf16.mxu0 0
    %326 = vmatpush1.bf16.msra.mxu0 %v256
    %327 = vmatprep.subr.bf16.mxu0 0
    %328 = vmatpush1.bf16.msra.mxu0 0
    %329 = vmatprep.subr.bf16.mxu0 0
    %330 = vmatpush1.bf16.msra.mxu0 0
    %331 = vmatprep.subr.bf16.mxu0 0
    %332 = vmatpush1.bf16.msra.mxu0 0
    %333 = vmatprep.subr.bf16.mxu0 0
    %334 = vmatpush1.bf16.msra.mxu0 0
    %335 = vmatprep.subr.bf16.mxu0 0
    %336 = vmatpush1.bf16.msra.mxu0 0
    %337 = vmatprep.subr.bf16.mxu0 0
    %338 = vmatpush1.bf16.msra.mxu0 0
    %339 = vmatprep.subr.bf16.mxu0 0
    %340 = vmatpush1.bf16.msra.mxu0 0
    %341 = vmatprep.subr.bf16.mxu0 0
    %342 = vmatpush1.bf16.msra.mxu0 0
    %343 = vmatprep.subr.bf16.mxu0 0
    %344 = vmatpush1.bf16.msra.mxu0 0
    %345 = vmatprep.subr.bf16.mxu0 0
    %346 = vmatpush1.bf16.msra.mxu0 0
    %347 = vmatprep.subr.bf16.mxu0 0
    %348 = vmatpush1.bf16.msra.mxu0 0
    %349 = vmatprep.subr.bf16.mxu0 0
    %350 = vmatpush1.bf16.msra.mxu0 0
    %351 = vmatprep.subr.bf16.mxu0 0
    %352 = vmatpush1.bf16.msra.mxu0 0
    %353 = vmatprep.mubr.bf16.mxu0 0
    %354 = vmatmul.mubr.bf16.gmra.mrb[0].mxu0 %v278
    %v355 = vpop.f32.mrb[0].mxu0
    %v356 = vadd.f32 %v315, %v355
    %v357 = vpop.f32.mrb[0].mxu0
    %v358 = vpop.f32.mrb[0].mxu0
    %v359 = vadd.f32 %v318, %v358
    %v360 = vpop.f32.mrb[0].mxu0
    %361 = vdwg.mxu0
    %v400 = vunpack.c.l.b16 %v85
    %v401 = vunpack.c.l.b16 %v86
    %v402 = vunpack.c.l.b16 %v87
    %v403 = vunpack.c.l.b16 %v88
    %v404 = vunpack.c.l.b16 %v89
    %v405 = vunpack.c.l.b16 %v90
    %v406 = vunpack.c.l.b16 %v91
    %v407 = vunpack.c.l.b16 %v92
    %v408 = vunpack.c.l.b16 %v93
    %v409 = vunpack.c.l.b16 %v94
    %v410 = vunpack.c.l.b16 %v95
    %v411 = vunpack.c.l.b16 %v96
    %v412 = vunpack.c.l.b16 %v97
    %v413 = vunpack.c.l.b16 %v98
    %v414 = vunpack.c.l.b16 %v99
    %v415 = vunpack.c.l.b16 %v100
    %v416 = vunpack.c.l.b16 %v101
    %v417 = vunpack.c.l.b16 %v102
    %v418 = vunpack.c.l.b16 %v103
    %v419 = vunpack.c.l.b16 %v104
    %v420 = vunpack.c.l.b16 %v105
    %v421 = vunpack.c.l.b16 %v106
    %v422 = vunpack.c.l.b16 %v107
    %v423 = vunpack.c.l.b16 %v108
    %v424 = vunpack.c.l.b16 %v109
    %v425 = vunpack.c.l.b16 %v110
    %v426 = vunpack.c.l.b16 %v111
    %v427 = vunpack.c.l.b16 %v112
    %v428 = vunpack.c.l.b16 %v113
    %v429 = vunpack.c.l.b16 %v114
    %v430 = vunpack.c.l.b16 %v115
    %v431 = vunpack.c.l.b16 %v116
    %v432 = vunpack.c.l.b16 %v117
    %v433 = vunpack.c.l.b16 %v118
    %v434 = vunpack.c.l.b16 %v119
    %v435 = vunpack.c.l.b16 %v120
    %v436 = vunpack.c.l.b16 %v121
    %v437 = vunpack.c.l.b16 %v122
    %v438 = vpack.c.b16 %v401, %v400
    %v439 = vpack.c.b16 %v403, %v402
    %v440 = vpack.c.b16 %v405, %v404
    %v441 = vpack.c.b16 %v407, %v406
    %v442 = vpack.c.b16 %v409, %v408
    %v443 = vpack.c.b16 %v411, %v410
    %v444 = vpack.c.b16 %v413, %v412
    %v445 = vpack.c.b16 %v415, %v414
    %v446 = vpack.c.b16 %v417, %v416
    %v447 = vpack.c.b16 %v419, %v418
    %v448 = vpack.c.b16 %v421, %v420
    %v449 = vpack.c.b16 %v423, %v422
    %v450 = vpack.c.b16 %v425, %v424
    %v451 = vpack.c.b16 %v427, %v426
    %v452 = vpack.c.b16 %v429, %v428
    %v453 = vpack.c.b16 %v431, %v430
    %v454 = vpack.c.b16 %v433, %v432
    %v455 = vpack.c.b16 %v435, %v434
    %v456 = vpack.c.b16 %v437, %v436
    %476 = vmatprep.subr.bf16.mxu0 0
    %477 = vmatpush1.bf16.msra.mxu0 %v438
    %478 = vmatprep.subr.bf16.mxu0 0
    %479 = vmatpush1.bf16.msra.mxu0 %v439
    %480 = vmatprep.subr.bf16.mxu0 0
    %481 = vmatpush1.bf16.msra.mxu0 %v440
    %482 = vmatprep.subr.bf16.mxu0 0
    %483 = vmatpush1.bf16.msra.mxu0 %v441
    %484 = vmatprep.subr.bf16.mxu0 0
    %485 = vmatpush1.bf16.msra.mxu0 %v442
    %486 = vmatprep.subr.bf16.mxu0 0
    %487 = vmatpush1.bf16.msra.mxu0 %v443
    %488 = vmatprep.subr.bf16.mxu0 0
    %489 = vmatpush1.bf16.msra.mxu0 %v444
    %490 = vmatprep.subr.bf16.mxu0 0
    %491 = vmatpush1.bf16.msra.mxu0 %v445
    %492 = vmatprep.subr.bf16.mxu0 0
    %493 = vmatpush1.bf16.msra.mxu0 %v446
    %494 = vmatprep.subr.bf16.mxu0 0
    %495 = vmatpush1.bf16.msra.mxu0 %v447
    %496 = vmatprep.subr.bf16.mxu0 0
    %497 = vmatpush1.bf16.msra.mxu0 %v448
    %498 = vmatprep.subr.bf16.mxu0 0
    %499 = vmatpush1.bf16.msra.mxu0 %v449
    %500 = vmatprep.subr.bf16.mxu0 0
    %501 = vmatpush1.bf16.msra.mxu0 %v450
    %502 = vmatprep.subr.bf16.mxu0 0
    %503 = vmatpush1.bf16.msra.mxu0 %v451
    %504 = vmatprep.subr.bf16.mxu0 0
    %505 = vmatpush1.bf16.msra.mxu0 %v452
    %506 = vmatprep.subr.bf16.mxu0 0
    %507 = vmatpush1.bf16.msra.mxu0 %v453
    %508 = vmatprep.mubr.bf16.mxu0 %v83
    %509 = vmatmul.mubr.bf16.gmra.mrb[0].mxu0 %v82
    %v510 = vpop.f32.mrb[0].mxu0
    %v511 = vadd.f32 %v356, %v510
    %v512 = vpop.f32.mrb[0].mxu0
    %v513 = vpop.f32.mrb[0].mxu0
    %v514 = vadd.f32 %v359, %v513
    %v515 = vpop.f32.mrb[0].mxu0
    %516 = vdwg.mxu0
    %517 = vmatprep.subr.bf16.mxu0 0
    %518 = vmatpush1.bf16.msra.mxu0 %v454
    %519 = vmatprep.subr.bf16.mxu0 0
    %520 = vmatpush1.bf16.msra.mxu0 %v455
    %521 = vmatprep.subr.bf16.mxu0 0
    %522 = vmatpush1.bf16.msra.mxu0 %v456
    %523 = vmatprep.subr.bf16.mxu0 0
    %524 = vmatpush1.bf16.msra.mxu0 0
    %525 = vmatprep.subr.bf16.mxu0 0
    %526 = vmatpush1.bf16.msra.mxu0 0
    %527 = vmatprep.subr.bf16.mxu0 0
    %528 = vmatpush1.bf16.msra.mxu0 0
    %529 = vmatprep.subr.bf16.mxu0 0
    %530 = vmatpush1.bf16.msra.mxu0 0
    %531 = vmatprep.subr.bf16.mxu0 0
    %532 = vmatpush1.bf16.msra.mxu0 0
    %533 = vmatprep.subr.bf16.mxu0 0
    %534 = vmatpush1.bf16.msra.mxu0 0
    %535 = vmatprep.subr.bf16.mxu0 0
    %536 = vmatpush1.bf16.msra.mxu0 0
    %537 = vmatprep.subr.bf16.mxu0 0
    %538 = vmatpush1.bf16.msra.mxu0 0
    %539 = vmatprep.subr.bf16.mxu0 0
    %540 = vmatpush1.bf16.msra.mxu0 0
    %541 = vmatprep.subr.bf16.mxu0 0
    %542 = vmatpush1.bf16.msra.mxu0 0
    %543 = vmatprep.subr.bf16.mxu0 0
    %544 = vmatpush1.bf16.msra.mxu0 0
    %545 = vmatprep.subr.bf16.mxu0 0
    %546 = vmatpush1.bf16.msra.mxu0 0
    %547 = vmatprep.subr.bf16.mxu0 0
    %548 = vmatpush1.bf16.msra.mxu0 0
    %549 = vmatprep.mubr.bf16.mxu0 0
    %550 = vmatmul.mubr.bf16.gmra.mrb[0].mxu0 %v278
    %v551 = vpop.f32.mrb[0].mxu0
    %v552 = vadd.f32 %v511, %v551
    %v553 = vpop.f32.mrb[0].mxu0
    %v554 = vpop.f32.mrb[0].mxu0
    %v555 = vadd.f32 %v514, %v554
    %v556 = vpop.f32.mrb[0].mxu0
    %557 = vdwg.mxu0
    %s558 = scalar_lea.vmem [#allocation2], 304
    %v559 = vld [vmem:[%s558] sm:$0xf]
    %v560 = vld [vmem:[%s558 + $0x4] sm:$0xf]
    %v561 = vld [vmem:[%s558 + $0x8] sm:$0xf]
    %v562 = vld [vmem:[%s558 + $0xc] sm:$0xf]
    %v563 = vld [vmem:[%s558 + $0x10] sm:$0xf]
    %v564 = vld [vmem:[%s558 + $0x14] sm:$0xf]
    %v565 = vld [vmem:[%s558 + $0x18] sm:$0xf]
    %v566 = vld [vmem:[%s558 + $0x1c] sm:$0xf]
    %v567 = vld [vmem:[%s558 + $0x20] sm:$0xf]
    %v568 = vld [vmem:[%s558 + $0x24] sm:$0xf]
    %v569 = vld [vmem:[%s558 + $0x28] sm:$0xf]
    %v570 = vld [vmem:[%s558 + $0x2c] sm:$0xf]
    %v571 = vld [vmem:[%s558 + $0x30] sm:$0xf]
    %v572 = vld [vmem:[%s558 + $0x34] sm:$0xf]
    %v573 = vld [vmem:[%s558 + $0x38] sm:$0xf]
    %v574 = vld [vmem:[%s558 + $0x3c] sm:$0xf]
    %v575 = vld [vmem:[%s558 + $0x40] sm:$0xf]
    %v576 = vld [vmem:[%s558 + $0x44] sm:$0xf]
    %v577 = vld [vmem:[%s558 + $0x48] sm:$0xf]
    %v578 = vld [vmem:[%s558 + $0x4c] sm:$0xf]
    %v579 = vld [vmem:[%s558 + $0x50] sm:$0xf]
    %v580 = vld [vmem:[%s558 + $0x54] sm:$0xf]
    %v581 = vld [vmem:[%s558 + $0x58] sm:$0xf]
    %v582 = vld [vmem:[%s558 + $0x5c] sm:$0xf]
    %v583 = vld [vmem:[%s558 + $0x60] sm:$0xf]
    %v584 = vld [vmem:[%s558 + $0x64] sm:$0xf]
    %v585 = vld [vmem:[%s558 + $0x68] sm:$0xf]
    %v586 = vld [vmem:[%s558 + $0x6c] sm:$0xf]
    %v587 = vld [vmem:[%s558 + $0x70] sm:$0xf]
    %v588 = vld [vmem:[%s558 + $0x74] sm:$0xf]
    %v589 = vld [vmem:[%s558 + $0x78] sm:$0xf]
    %v590 = vld [vmem:[%s558 + $0x7c] sm:$0xf]
    %v591 = vld [vmem:[%s558 + $0x80] sm:$0xf]
    %v592 = vld [vmem:[%s558 + $0x84] sm:$0xf]
    %v593 = vld [vmem:[%s558 + $0x88] sm:$0xf]
    %v594 = vld [vmem:[%s558 + $0x8c] sm:$0xf]
    %v595 = vld [vmem:[%s558 + $0x90] sm:$0xf]
    %v596 = vld [vmem:[%s558 + $0x94] sm:$0xf]
    %v635 = vunpack.c.l.b16 %v559
    %v636 = vunpack.c.l.b16 %v560
    %v637 = vunpack.c.l.b16 %v561
    %v638 = vunpack.c.l.b16 %v562
    %v639 = vunpack.c.l.b16 %v563
    %v640 = vunpack.c.l.b16 %v564
    %v641 = vunpack.c.l.b16 %v565
    %v642 = vunpack.c.l.b16 %v566
    %v643 = vunpack.c.l.b16 %v567
    %v644 = vunpack.c.l.b16 %v568
    %v645 = vunpack.c.l.b16 %v569
    %v646 = vunpack.c.l.b16 %v570
    %v647 = vunpack.c.l.b16 %v571
    %v648 = vunpack.c.l.b16 %v572
    %v649 = vunpack.c.l.b16 %v573
    %v650 = vunpack.c.l.b16 %v574
    %v651 = vunpack.c.l.b16 %v575
    %v652 = vunpack.c.l.b16 %v576
    %v653 = vunpack.c.l.b16 %v577
    %v654 = vunpack.c.l.b16 %v578
    %v655 = vunpack.c.l.b16 %v579
    %v656 = vunpack.c.l.b16 %v580
    %v657 = vunpack.c.l.b16 %v581
    %v658 = vunpack.c.l.b16 %v582
    %v659 = vunpack.c.l.b16 %v583
    %v660 = vunpack.c.l.b16 %v584
    %v661 = vunpack.c.l.b16 %v585
    %v662 = vunpack.c.l.b16 %v586
    %v663 = vunpack.c.l.b16 %v587
    %v664 = vunpack.c.l.b16 %v588
    %v665 = vunpack.c.l.b16 %v589
    %v666 = vunpack.c.l.b16 %v590
    %v667 = vunpack.c.l.b16 %v591
    %v668 = vunpack.c.l.b16 %v592
    %v669 = vunpack.c.l.b16 %v593
    %v670 = vunpack.c.l.b16 %v594
    %v671 = vunpack.c.l.b16 %v595
    %v672 = vunpack.c.l.b16 %v596
    %v673 = vpack.c.b16 %v636, %v635
    %v674 = vpack.c.b16 %v638, %v637
    %v675 = vpack.c.b16 %v640, %v639
    %v676 = vpack.c.b16 %v642, %v641
    %v677 = vpack.c.b16 %v644, %v643
    %v678 = vpack.c.b16 %v646, %v645
    %v679 = vpack.c.b16 %v648, %v647
    %v680 = vpack.c.b16 %v650, %v649
    %v681 = vpack.c.b16 %v652, %v651
    %v682 = vpack.c.b16 %v654, %v653
    %v683 = vpack.c.b16 %v656, %v655
    %v684 = vpack.c.b16 %v658, %v657
    %v685 = vpack.c.b16 %v660, %v659
    %v686 = vpack.c.b16 %v662, %v661
    %v687 = vpack.c.b16 %v664, %v663
    %v688 = vpack.c.b16 %v666, %v665
    %v689 = vpack.c.b16 %v668, %v667
    %v690 = vpack.c.b16 %v670, %v669
    %v691 = vpack.c.b16 %v672, %v671
    %711 = vmatprep.subr.bf16.mxu0 0
    %712 = vmatpush1.bf16.msra.mxu0 %v673
    %713 = vmatprep.subr.bf16.mxu0 0
    %714 = vmatpush1.bf16.msra.mxu0 %v674
    %715 = vmatprep.subr.bf16.mxu0 0
    %716 = vmatpush1.bf16.msra.mxu0 %v675
    %717 = vmatprep.subr.bf16.mxu0 0
    %718 = vmatpush1.bf16.msra.mxu0 %v676
    %719 = vmatprep.subr.bf16.mxu0 0
    %720 = vmatpush1.bf16.msra.mxu0 %v677
    %721 = vmatprep.subr.bf16.mxu0 0
    %722 = vmatpush1.bf16.msra.mxu0 %v678
    %723 = vmatprep.subr.bf16.mxu0 0
    %724 = vmatpush1.bf16.msra.mxu0 %v679
    %725 = vmatprep.subr.bf16.mxu0 0
    %726 = vmatpush1.bf16.msra.mxu0 %v680
    %727 = vmatprep.subr.bf16.mxu0 0
    %728 = vmatpush1.bf16.msra.mxu0 %v681
    %729 = vmatprep.subr.bf16.mxu0 0
    %730 = vmatpush1.bf16.msra.mxu0 %v682
    %731 = vmatprep.subr.bf16.mxu0 0
    %732 = vmatpush1.bf16.msra.mxu0 %v683
    %733 = vmatprep.subr.bf16.mxu0 0
    %734 = vmatpush1.bf16.msra.mxu0 %v684
    %735 = vmatprep.subr.bf16.mxu0 0
    %736 = vmatpush1.bf16.msra.mxu0 %v685
    %737 = vmatprep.subr.bf16.mxu0 0
    %738 = vmatpush1.bf16.msra.mxu0 %v686
    %739 = vmatprep.subr.bf16.mxu0 0
    %740 = vmatpush1.bf16.msra.mxu0 %v687
    %741 = vmatprep.subr.bf16.mxu0 0
    %742 = vmatpush1.bf16.msra.mxu0 %v688
    %743 = vmatprep.mubr.bf16.mxu0 %v83
    %744 = vmatmul.mubr.bf16.gmra.mrb[0].mxu0 %v82
    %v745 = vpop.f32.mrb[0].mxu0
    %v746 = vadd.f32 0.0, %v745
    %v747 = vpop.f32.mrb[0].mxu0
    %v748 = vpop.f32.mrb[0].mxu0
    %v749 = vadd.f32 0.0, %v748
    %v750 = vpop.f32.mrb[0].mxu0
    %751 = vdwg.mxu0
    %752 = vmatprep.subr.bf16.mxu0 0
    %753 = vmatpush1.bf16.msra.mxu0 %v689
    %754 = vmatprep.subr.bf16.mxu0 0
    %755 = vmatpush1.bf16.msra.mxu0 %v690
    %756 = vmatprep.subr.bf16.mxu0 0
    %757 = vmatpush1.bf16.msra.mxu0 %v691
    %758 = vmatprep.subr.bf16.mxu0 0
    %759 = vmatpush1.bf16.msra.mxu0 0
    %760 = vmatprep.subr.bf16.mxu0 0
    %761 = vmatpush1.bf16.msra.mxu0 0
    %762 = vmatprep.subr.bf16.mxu0 0
    %763 = vmatpush1.bf16.msra.mxu0 0
    %764 = vmatprep.subr.bf16.mxu0 0
    %765 = vmatpush1.bf16.msra.mxu0 0
    %766 = vmatprep.subr.bf16.mxu0 0
    %767 = vmatpush1.bf16.msra.mxu0 0
    %768 = vmatprep.subr.bf16.mxu0 0
    %769 = vmatpush1.bf16.msra.mxu0 0
    %770 = vmatprep.subr.bf16.mxu0 0
    %771 = vmatpush1.bf16.msra.mxu0 0
    %772 = vmatprep.subr.bf16.mxu0 0
    %773 = vmatpush1.bf16.msra.mxu0 0
    %774 = vmatprep.subr.bf16.mxu0 0
    %775 = vmatpush1.bf16.msra.mxu0 0
    %776 = vmatprep.subr.bf16.mxu0 0
    %777 = vmatpush1.bf16.msra.mxu0 0
    %778 = vmatprep.subr.bf16.mxu0 0
    %779 = vmatpush1.bf16.msra.mxu0 0
    %780 = vmatprep.subr.bf16.mxu0 0
    %781 = vmatpush1.bf16.msra.mxu0 0
    %782 = vmatprep.subr.bf16.mxu0 0
    %783 = vmatpush1.bf16.msra.mxu0 0
    %784 = vmatprep.mubr.bf16.mxu0 0
    %785 = vmatmul.mubr.bf16.gmra.mrb[0].mxu0 %v278
    %v786 = vpop.f32.mrb[0].mxu0
    %v787 = vadd.f32 %v746, %v786
    %v788 = vpop.f32.mrb[0].mxu0
    %v789 = vpop.f32.mrb[0].mxu0
    %v790 = vadd.f32 %v749, %v789
    %v791 = vpop.f32.mrb[0].mxu0
    %792 = vdwg.mxu0
    %v793 = vadd.f32 %v552, %v787
    %v794 = vadd.f32 %v555, %v790
    %v795 = vld [vmem:[%s1] sm:$0xff]
    %v796 = vld [vmem:[%s1 + $0x8] sm:$0xff]
    %v797 = vadd.f32 %v795, %v793
    %v798 = vadd.f32 %v796, %v794
    %799 = vst [vmem:[#allocation5] sm:$0xff] %v797
    %800 = vst [vmem:[#allocation5 + $0x8] sm:$0xff] %v798
    // Predicated region
    $region18: #{tpu_custom_call.1} parent=1 // pred_check
      _
    $region19: #{tpu_custom_call.1} parent=1 // pred_check_branch
      %802 = sbr.rel (0) target = $region21
    $region20: #{tpu_custom_call.1} parent=1 // pred_region
      %s804 = ssub.s32 256, 256
      %805 = vsyncadd [#allocation4], %s804
      %s806 = sshll.u32 [#allocation5], 4
      %s807 = int_to_ptr.vmem [resolvable:$true] %s806
      %812 = dma.vmem_to_hbm [thread:$0]  %s807, 256, %s3, [#allocation4], 128, 128, 8
    $region21: #{tpu_custom_call.1} parent=1 // pred_fallthru
      _
    // Predicated region
    $region22: #{tpu_custom_call.1} parent=1 // pred_check
      _
    $region23: #{tpu_custom_call.1} parent=1 // pred_check_branch
      %814 = sbr.rel (0) target = $region25
    $region24: #{tpu_custom_call.1} parent=1 // pred_region
      %815 = dma.done [#allocation4], 256
    $region25: #{tpu_custom_call.1} parent=1 // pred_fallthru
      _
    %816 = vsyncpa [#allocation3], 1
    %817 = vsyncpa [#allocation4], 1

</llo_original>
